<compile_context>
chip_gen: v5e
topology: v5e:2x2
jax: 0.10.0
libtpu: 0.0.40
codegen_flags: <defaults>
</compile_context>

<pallas_src>
import functools

import jax
import jax.numpy as jnp
from jax.experimental import pallas as pl
from jax.experimental.pallas import tpu as pltpu

IN_FEATURES = 512
NUM_CLASSES = 100
_LANE = 128
_SUBLANE_BF16 = 16          # bf16 packs 16 rows per sublane tile
_TILE_B_MAX = 2048          # ~6.5 MiB double-buffered -> fits v5e/v6e/v7x defaults
_NEG_INF = -1e30


def _round_up(n, m):
    return ((n + m - 1) // m) * m


def _linear_softmax_kernel(x_ref, w_ref, b_ref, o_ref):
    # bf16 x bf16 matmul on the MXU with f32 accumulation.
    logits = jnp.dot(x_ref[...], w_ref[...], preferred_element_type=jnp.float32)
    logits = logits + b_ref[...]                 # (TB, Cp) + (1, Cp), f32
    m = jnp.max(logits, axis=1, keepdims=True)   # (TB, 1)
    e = jnp.exp(logits - m)                      # padded cols: exp(-1e30 - m) == 0
    denom = jnp.sum(e, axis=1, keepdims=True)    # (TB, 1)
    # Exact normalization (approx reciprocal broke the row-sum tolerance).
    o_ref[...] = (e / denom).astype(o_ref.dtype)


def prepare_params(w, b):
    """One-time (out of the per-call path) padding of params to a 128-lane class dim.

    w: (512, num_classes) float32   (transposed PyTorch Linear weight)
    b: (num_classes,) float32
    Returns bf16 weight (K, Cp) and f32 bias (1, Cp) with -1e30 in padded lanes.
    """
    K, C = w.shape
    Cp = _round_up(C, _LANE)
    w_p = jnp.zeros((K, Cp), jnp.bfloat16).at[:, :C].set(w.astype(jnp.bfloat16))
    b_p = jnp.full((1, Cp), _NEG_INF, jnp.float32).at[0, :C].set(b.astype(jnp.float32))
    return w_p, b_p


@functools.partial(jax.jit, static_argnames=("num_classes", "tile_b"))
def mynet_forward_padded(x, w_p, b_p, *, num_classes=NUM_CLASSES, tile_b=_TILE_B_MAX):
    """softmax(x @ W + b, axis=1) with pre-padded params from prepare_params()."""
    B, K = x.shape
    Cp = w_p.shape[1]

    # bf16 activations: halves HBM read traffic of the dominant input.
    x_bf = x.astype(jnp.bfloat16)

    # Pad batch only to the bf16 sublane multiple (<= 15 extra rows); a ragged
    # last grid tile (when B > TB and not a multiple) is masked by Pallas.
    Bp = _round_up(B, _SUBLANE_BF16)
    if Bp != B:
        x_bf = jnp.zeros((Bp, K), jnp.bfloat16).at[:B, :].set(x_bf)

    TB = min(tile_b, Bp)
    grid = (pl.cdiv(Bp, TB),)

    out_p = pl.pallas_call(
        _linear_softmax_kernel,
        out_shape=jax.ShapeDtypeStruct((Bp, Cp), jnp.float32),
        grid_spec=pltpu.PrefetchScalarGridSpec(
            num_scalar_prefetch=0,
            grid=grid,
            in_specs=[
                pl.BlockSpec((TB, K), lambda i: (i, 0)),    # x: batch-tiled
                pl.BlockSpec((K, Cp), lambda i: (0, 0)),    # W: VMEM-resident
                pl.BlockSpec((1, Cp), lambda i: (0, 0)),    # b: VMEM-resident
            ],
            out_specs=pl.BlockSpec((TB, Cp), lambda i: (i, 0)),
        ),
        compiler_params=pltpu.CompilerParams(
            dimension_semantics=("parallel",),              # v7x dual-TC sharding
        ),
    )(x_bf, w_p, b_p)

    # Strip batch / class padding to match the PyTorch module's (B, num_classes).
    # TODO(synk): downstream consumers that tolerate a 128-wide padded output
    # could skip this slice and save one extra HBM pass over the output.
    return out_p[:B, :num_classes]


def mynet_forward(x, w, b):
    """Convenience wrapper: pads params then runs the kernel."""
    w_p, b_p = prepare_params(w, b)
    return mynet_forward_padded(x, w_p, b_p, num_classes=w.shape[1])


def init_params(key, num_classes=NUM_CLASSES, in_features=IN_FEATURES):
    # Mimic nn.Linear's default U(-1/sqrt(fan_in), 1/sqrt(fan_in)) init.
    kw, kb = jax.random.split(key)
    bound = 1.0 / jnp.sqrt(float(in_features))
    w = jax.random.uniform(kw, (in_features, num_classes), jnp.float32, -bound, bound)
    b = jax.random.uniform(kb, (num_classes,), jnp.float32, -bound, bound)
    return w, b


if __name__ == "__main__":
    key = jax.random.PRNGKey(0)
    kx, kp = jax.random.split(key)

    batch = 8
    x = jax.random.normal(kx, (batch, IN_FEATURES), dtype=jnp.float32)
    w, b = init_params(kp)

    # Params padded once (hoisted out of the per-call path).
    w_p, b_p = prepare_params(w, b)

    out = mynet_forward_padded(x, w_p, b_p)
    out = jax.block_until_ready(out)

    # Shape and exact softmax normalization (exact divide in the kernel).
    assert out.shape == (batch, NUM_CLASSES)
    assert jnp.allclose(jnp.sum(out, axis=1), 1.0, atol=1e-3), jnp.sum(out, axis=1)

    # Cross-check against a plain-JAX f32 reference (bf16 inputs -> modest tol).
    ref = jax.nn.softmax(x @ w + b, axis=1)
    assert jnp.allclose(out, ref, atol=2e-3), float(jnp.max(jnp.abs(out - ref)))

    print("KERNEL_OK")
</pallas_src>

<mosaic_0001>
module attributes {stable_mosaic.version = 11 : i64} {
  func.func @_linear_softmax_kernel(%arg0: i32, %arg1: memref<16x512xbf16, #tpu.memory_space<vmem>>, %arg2: memref<512x128xbf16, #tpu.memory_space<vmem>>, %arg3: memref<1x128xf32, #tpu.memory_space<vmem>>, %arg4: memref<16x128xf32, #tpu.memory_space<vmem>>) attributes {dimension_semantics = [#tpu.dimension_semantics<parallel>], iteration_bounds = array<i64: 1>, scalar_prefetch = 0 : i64, scratch_operands = 0 : i64, tpu.core_type = #tpu.core_type<tc>, window_params = [{transform_indices = @transform_0, window_bounds = array<i64: 16, 512>}, {pipeline_mode = #tpu.pipeline_mode<synchronous>, transform_indices = @transform_1, window_bounds = array<i64: 512, 128>}, {pipeline_mode = #tpu.pipeline_mode<synchronous>, transform_indices = @transform_2, window_bounds = array<i64: 1, 128>}, {transform_indices = @transform_3, window_bounds = array<i64: 16, 128>}]} {
    %c0 = arith.constant 0 : index
    %c0_0 = arith.constant 0 : index
    %0 = vector.load %arg1[%c0, %c0_0] : memref<16x512xbf16, #tpu.memory_space<vmem>>, vector<16x512xbf16>
    %c0_1 = arith.constant 0 : index
    %c0_2 = arith.constant 0 : index
    %1 = vector.load %arg2[%c0_1, %c0_2] : memref<512x128xbf16, #tpu.memory_space<vmem>>, vector<512x128xbf16>
    %cst = arith.constant dense<0.000000e+00> : vector<16x128xf32>
    %2 = tpu.matmul %0, %1, %cst {dimension_numbers = #tpu.dot_dimension_numbers<[1], [0], [0], [1], [0, 0, 1, 1], [], []>} : vector<16x512xbf16>, vector<512x128xbf16>, vector<16x128xf32> -> vector<16x128xf32>
    %c0_3 = arith.constant 0 : index
    %c0_4 = arith.constant 0 : index
    %3 = vector.load %arg3[%c0_3, %c0_4] : memref<1x128xf32, #tpu.memory_space<vmem>>, vector<1x128xf32>
    %4 = vector.broadcast %3 : vector<1x128xf32> to vector<16x128xf32>
    %5 = arith.addf %2, %4 : vector<16x128xf32>
    %cst_5 = arith.constant dense<0xFF800000> : vector<16xf32>
    %6 = vector.multi_reduction <maximumf>, %5, %cst_5 [1] : vector<16x128xf32> to vector<16xf32>
    %7 = vector.shape_cast %6 : vector<16xf32> to vector<16x1xf32>
    %8 = vector.broadcast %7 : vector<16x1xf32> to vector<16x128xf32>
    %9 = arith.subf %5, %8 : vector<16x128xf32>
    %10 = math.exp %9 : vector<16x128xf32>
    %cst_6 = arith.constant dense<0.000000e+00> : vector<16xf32>
    %11 = vector.multi_reduction <add>, %10, %cst_6 [1] : vector<16x128xf32> to vector<16xf32>
    %12 = vector.shape_cast %11 : vector<16xf32> to vector<16x1xf32>
    %13 = vector.broadcast %12 : vector<16x1xf32> to vector<16x128xf32>
    %14 = arith.divf %10, %13 : vector<16x128xf32>
    %c0_7 = arith.constant 0 : index
    %c0_8 = arith.constant 0 : index
    %15 = vector.load %arg4[%c0_7, %c0_8] : memref<16x128xf32, #tpu.memory_space<vmem>>, vector<16x128xf32>
    tpu.vector_store %arg4[%c0_7, %c0_8], %14 {strides = array<i32>} : memref<16x128xf32, #tpu.memory_space<vmem>>, vector<16x128xf32>,
    return
  }
  func.func @transform_0(%arg0: i32) -> (i32, i32) {
    %c0_i32 = arith.constant 0 : i32
    %c0_i32_0 = arith.constant 0 : i32
    return %arg0, %c0_i32 : i32, i32
  }
  func.func @transform_1(%arg0: i32) -> (i32, i32) {
    %c0_i32 = arith.constant 0 : i32
    %c0_i32_0 = arith.constant 0 : i32
    %c0_i32_1 = arith.constant 0 : i32
    return %c0_i32, %c0_i32_0 : i32, i32
  }
  func.func @transform_2(%arg0: i32) -> (i32, i32) {
    %c0_i32 = arith.constant 0 : i32
    %c0_i32_0 = arith.constant 0 : i32
    %c0_i32_1 = arith.constant 0 : i32
    return %c0_i32, %c0_i32_0 : i32, i32
  }
  func.func @transform_3(%arg0: i32) -> (i32, i32) {
    %c0_i32 = arith.constant 0 : i32
    %c0_i32_0 = arith.constant 0 : i32
    return %arg0, %c0_i32 : i32, i32
  }
}

</mosaic_0001>

<llo_original>
// kernel: mynet_forward_padded.1
$region0: #{mynet_forward_padded.1}
  #allocation0 [shape = 'u32[]', space=smem, size = 0x4, offset = 0x4, fixed_abs, tag = 'smem constant byte address 0x4 - core index']
  #allocation1 [shape = 'u32[72,128]{1,0:T(1,128)}', space=vmem, size = 0x9000, scoped, tag = 'internal scratch']
  %s0 = inlined_call_operand.vmem [shape: bf16[16,512], index: 0, kind: input, shape index: {}]
  %s1 = inlined_call_operand.hbm [shape: bf16[512,128], index: 1, kind: input, shape index: {}]
  %s2 = inlined_call_operand.vmem [shape: f32[1,128], index: 2, kind: input, shape index: {}]
  %s3 = inlined_call_operand.vmem [shape: f32[16,128], index: 3, kind: output, shape index: {}]
  %s4 = sld [smem:[#allocation0]]
  $region26: #{mynet_forward_padded.1} parent=0
    _
  %s6 = ssub.s32 1, %s4
  %s7 = scalar_select 0, %s6, %s4
  $region1: #{mynet_forward_padded.1} parent=0
    #allocation2 [shape = 'u8[131072]{0}', space=vmem, size = 0x20000, scoped, tag = 'input window, operand 1, single buffered']
    #allocation3 [shape = 's32[1]{0}', space=sflag, size = 0x4, scoped, tag = 'scoped memory for mynet_forward_padded.1']
    %8 = vsyncpa [#allocation3], 0
    // Predicated region
    $region2: #{mynet_forward_padded.1} parent=1 // pred_check
      _
    $region3: #{mynet_forward_padded.1} parent=1 // pred_check_branch
      %10 = sbr.rel (0) target = $region5
    $region4: #{mynet_forward_padded.1} parent=1 // pred_region
      _
    $region5: #{mynet_forward_padded.1} parent=1 // pred_fallthru
      _
    // Predicated region
    $region6: #{mynet_forward_padded.1} parent=1 // pred_check
      _
    $region7: #{mynet_forward_padded.1} parent=1 // pred_check_branch
      %12 = sbr.rel (0) target = $region9
    $region8: #{mynet_forward_padded.1} parent=1 // pred_region
      %14 = vsyncadd [#allocation3], 0
      %s15 = sshll.u32 %s1, 4
      %s16 = int_to_ptr.hbm [resolvable:$true] %s15
      %s17 = sshll.u32 [#allocation2], 4
      %s18 = int_to_ptr.vmem [resolvable:$true] %s17
      %23 = dma.hbm_to_vmem [thread:$0]  %s16, 4096, %s18, [#allocation3], 64, 64, 4
    $region9: #{mynet_forward_padded.1} parent=1 // pred_fallthru
      _
    // Predicated region
    $region10: #{mynet_forward_padded.1} parent=1 // pred_check
      _
    $region11: #{mynet_forward_padded.1} parent=1 // pred_check_branch
      %25 = sbr.rel (0) target = $region13
    $region12: #{mynet_forward_padded.1} parent=1 // pred_region
      _
    $region13: #{mynet_forward_padded.1} parent=1 // pred_fallthru
      _
    // Predicated region
    $region14: #{mynet_forward_padded.1} parent=1 // pred_check
      _
    $region15: #{mynet_forward_padded.1} parent=1 // pred_check_branch
      %27 = sbr.rel (0) target = $region17
    $region16: #{mynet_forward_padded.1} parent=1 // pred_region
      %29 = dma.done [#allocation3], 4096
    $region17: #{mynet_forward_padded.1} parent=1 // pred_fallthru
      _
    %v30 = vld [vmem:[%s0] sm:$0xff]
    %v31 = vld [vmem:[%s0 + $0x8] sm:$0xff]
    %v32 = vld [vmem:[%s0 + $0x10] sm:$0xff]
    %v33 = vld [vmem:[%s0 + $0x18] sm:$0xff]
    %v34 = vld [vmem:[#allocation2] sm:$0xf]
    %v35 = vld [vmem:[#allocation2 + $0x4] sm:$0xf]
    %v36 = vld [vmem:[#allocation2 + $0x8] sm:$0xf]
    %v37 = vld [vmem:[#allocation2 + $0xc] sm:$0xf]
    %v38 = vld [vmem:[#allocation2 + $0x10] sm:$0xf]
    %v39 = vld [vmem:[#allocation2 + $0x14] sm:$0xf]
    %v40 = vld [vmem:[#allocation2 + $0x18] sm:$0xf]
    %v41 = vld [vmem:[#allocation2 + $0x1c] sm:$0xf]
    %v42 = vld [vmem:[#allocation2 + $0x20] sm:$0xf]
    %v43 = vld [vmem:[#allocation2 + $0x24] sm:$0xf]
    %v44 = vld [vmem:[#allocation2 + $0x28] sm:$0xf]
    %v45 = vld [vmem:[#allocation2 + $0x2c] sm:$0xf]
    %v46 = vld [vmem:[#allocation2 + $0x30] sm:$0xf]
    %v47 = vld [vmem:[#allocation2 + $0x34] sm:$0xf]
    %v48 = vld [vmem:[#allocation2 + $0x38] sm:$0xf]
    %v49 = vld [vmem:[#allocation2 + $0x3c] sm:$0xf]
    %v50 = vld [vmem:[#allocation2 + $0x40] sm:$0xf]
    %v51 = vld [vmem:[#allocation2 + $0x44] sm:$0xf]
    %v52 = vld [vmem:[#allocation2 + $0x48] sm:$0xf]
    %v53 = vld [vmem:[#allocation2 + $0x4c] sm:$0xf]
    %v54 = vld [vmem:[#allocation2 + $0x50] sm:$0xf]
    %v55 = vld [vmem:[#allocation2 + $0x54] sm:$0xf]
    %v56 = vld [vmem:[#allocation2 + $0x58] sm:$0xf]
    %v57 = vld [vmem:[#allocation2 + $0x5c] sm:$0xf]
    %v58 = vld [vmem:[#allocation2 + $0x60] sm:$0xf]
    %v59 = vld [vmem:[#allocation2 + $0x64] sm:$0xf]
    %v60 = vld [vmem:[#allocation2 + $0x68] sm:$0xf]
    %v61 = vld [vmem:[#allocation2 + $0x6c] sm:$0xf]
    %v62 = vld [vmem:[#allocation2 + $0x70] sm:$0xf]
    %v63 = vld [vmem:[#allocation2 + $0x74] sm:$0xf]
    %v64 = vld [vmem:[#allocation2 + $0x78] sm:$0xf]
    %v65 = vld [vmem:[#allocation2 + $0x7c] sm:$0xf]
    %v66 = vld [vmem:[#allocation2 + $0x80] sm:$0xf]
    %v67 = vld [vmem:[#allocation2 + $0x84] sm:$0xf]
    %v68 = vld [vmem:[#allocation2 + $0x88] sm:$0xf]
    %v69 = vld [vmem:[#allocation2 + $0x8c] sm:$0xf]
    %v70 = vld [vmem:[#allocation2 + $0x90] sm:$0xf]
    %v71 = vld [vmem:[#allocation2 + $0x94] sm:$0xf]
    %v72 = vld [vmem:[#allocation2 + $0x98] sm:$0xf]
    %v73 = vld [vmem:[#allocation2 + $0x9c] sm:$0xf]
    %v74 = vld [vmem:[#allocation2 + $0xa0] sm:$0xf]
    %v75 = vld [vmem:[#allocation2 + $0xa4] sm:$0xf]
    %v76 = vld [vmem:[#allocation2 + $0xa8] sm:$0xf]
    %v77 = vld [vmem:[#allocation2 + $0xac] sm:$0xf]
    %v78 = vld [vmem:[#allocation2 + $0xb0] sm:$0xf]
    %v79 = vld [vmem:[#allocation2 + $0xb4] sm:$0xf]
    %v80 = vld [vmem:[#allocation2 + $0xb8] sm:$0xf]
    %v81 = vld [vmem:[#allocation2 + $0xbc] sm:$0xf]
    %v82 = vld [vmem:[#allocation2 + $0xc0] sm:$0xf]
    %v83 = vld [vmem:[#allocation2 + $0xc4] sm:$0xf]
    %v84 = vld [vmem:[#allocation2 + $0xc8] sm:$0xf]
    %v85 = vld [vmem:[#allocation2 + $0xcc] sm:$0xf]
    %v86 = vld [vmem:[#allocation2 + $0xd0] sm:$0xf]
    %v87 = vld [vmem:[#allocation2 + $0xd4] sm:$0xf]
    %v88 = vld [vmem:[#allocation2 + $0xd8] sm:$0xf]
    %v89 = vld [vmem:[#allocation2 + $0xdc] sm:$0xf]
    %v90 = vld [vmem:[#allocation2 + $0xe0] sm:$0xf]
    %v91 = vld [vmem:[#allocation2 + $0xe4] sm:$0xf]
    %v92 = vld [vmem:[#allocation2 + $0xe8] sm:$0xf]
    %v93 = vld [vmem:[#allocation2 + $0xec] sm:$0xf]
    %v94 = vld [vmem:[#allocation2 + $0xf0] sm:$0xf]
    %v95 = vld [vmem:[#allocation2 + $0xf4] sm:$0xf]
    %v96 = vld [vmem:[#allocation2 + $0xf8] sm:$0xf]
    %v97 = vld [vmem:[#allocation2 + $0xfc] sm:$0xf]
    %v98 = vld [vmem:[%s2] sm:$0x1]
    %v100 = vperm.slane %v98, 0
    %v106 = vunpack.c.l.b16 %v30
    %v107 = vunpack.c.h.b16 %v30
    %v108 = vunpack.c.l.b16 %v31
    %v109 = vunpack.c.h.b16 %v31
    %v110 = vunpack.c.l.b16 %v32
    %v111 = vunpack.c.h.b16 %v32
    %v112 = vunpack.c.l.b16 %v33
    %v113 = vunpack.c.h.b16 %v33
    %v114 = vpack.c.b16 %v110, %v106
    %v115 = vpack.c.b16 %v111, %v107
    %v116 = vpack.c.b16 %v112, %v108
    %v117 = vpack.c.b16 %v113, %v109
    %v186 = vunpack.c.l.b16 %v34
    %v187 = vunpack.c.l.b16 %v35
    %v188 = vunpack.c.l.b16 %v36
    %v189 = vunpack.c.l.b16 %v37
    %v190 = vunpack.c.l.b16 %v38
    %v191 = vunpack.c.l.b16 %v39
    %v192 = vunpack.c.l.b16 %v40
    %v193 = vunpack.c.l.b16 %v41
    %v194 = vunpack.c.l.b16 %v42
    %v195 = vunpack.c.l.b16 %v43
    %v196 = vunpack.c.l.b16 %v44
    %v197 = vunpack.c.l.b16 %v45
    %v198 = vunpack.c.l.b16 %v46
    %v199 = vunpack.c.l.b16 %v47
    %v200 = vunpack.c.l.b16 %v48
    %v201 = vunpack.c.l.b16 %v49
    %v202 = vunpack.c.l.b16 %v50
    %v203 = vunpack.c.l.b16 %v51
    %v204 = vunpack.c.l.b16 %v52
    %v205 = vunpack.c.l.b16 %v53
    %v206 = vunpack.c.l.b16 %v54
    %v207 = vunpack.c.l.b16 %v55
    %v208 = vunpack.c.l.b16 %v56
    %v209 = vunpack.c.l.b16 %v57
    %v210 = vunpack.c.l.b16 %v58
    %v211 = vunpack.c.l.b16 %v59
    %v212 = vunpack.c.l.b16 %v60
    %v213 = vunpack.c.l.b16 %v61
    %v214 = vunpack.c.l.b16 %v62
    %v215 = vunpack.c.l.b16 %v63
    %v216 = vunpack.c.l.b16 %v64
    %v217 = vunpack.c.l.b16 %v65
    %v218 = vunpack.c.l.b16 %v66
    %v219 = vunpack.c.l.b16 %v67
    %v220 = vunpack.c.l.b16 %v68
    %v221 = vunpack.c.l.b16 %v69
    %v222 = vunpack.c.l.b16 %v70
    %v223 = vunpack.c.l.b16 %v71
    %v224 = vunpack.c.l.b16 %v72
    %v225 = vunpack.c.l.b16 %v73
    %v226 = vunpack.c.l.b16 %v74
    %v227 = vunpack.c.l.b16 %v75
    %v228 = vunpack.c.l.b16 %v76
    %v229 = vunpack.c.l.b16 %v77
    %v230 = vunpack.c.l.b16 %v78
    %v231 = vunpack.c.l.b16 %v79
    %v232 = vunpack.c.l.b16 %v80
    %v233 = vunpack.c.l.b16 %v81
    %v234 = vunpack.c.l.b16 %v82
    %v235 = vunpack.c.l.b16 %v83
    %v236 = vunpack.c.l.b16 %v84
    %v237 = vunpack.c.l.b16 %v85
    %v238 = vunpack.c.l.b16 %v86
    %v239 = vunpack.c.l.b16 %v87
    %v240 = vunpack.c.l.b16 %v88
    %v241 = vunpack.c.l.b16 %v89
    %v242 = vunpack.c.l.b16 %v90
    %v243 = vunpack.c.l.b16 %v91
    %v244 = vunpack.c.l.b16 %v92
    %v245 = vunpack.c.l.b16 %v93
    %v246 = vunpack.c.l.b16 %v94
    %v247 = vunpack.c.l.b16 %v95
    %v248 = vunpack.c.l.b16 %v96
    %v249 = vunpack.c.l.b16 %v97
    %v250 = vpack.c.b16 %v187, %v186
    %v251 = vpack.c.b16 %v189, %v188
    %v252 = vpack.c.b16 %v191, %v190
    %v253 = vpack.c.b16 %v193, %v192
    %v254 = vpack.c.b16 %v195, %v194
    %v255 = vpack.c.b16 %v197, %v196
    %v256 = vpack.c.b16 %v199, %v198
    %v257 = vpack.c.b16 %v201, %v200
    %v258 = vpack.c.b16 %v203, %v202
    %v259 = vpack.c.b16 %v205, %v204
    %v260 = vpack.c.b16 %v207, %v206
    %v261 = vpack.c.b16 %v209, %v208
    %v262 = vpack.c.b16 %v211, %v210
    %v263 = vpack.c.b16 %v213, %v212
    %v264 = vpack.c.b16 %v215, %v214
    %v265 = vpack.c.b16 %v217, %v216
    %v266 = vpack.c.b16 %v219, %v218
    %v267 = vpack.c.b16 %v221, %v220
    %v268 = vpack.c.b16 %v223, %v222
    %v269 = vpack.c.b16 %v225, %v224
    %v270 = vpack.c.b16 %v227, %v226
    %v271 = vpack.c.b16 %v229, %v228
    %v272 = vpack.c.b16 %v231, %v230
    %v273 = vpack.c.b16 %v233, %v232
    %v274 = vpack.c.b16 %v235, %v234
    %v275 = vpack.c.b16 %v237, %v236
    %v276 = vpack.c.b16 %v239, %v238
    %v277 = vpack.c.b16 %v241, %v240
    %v278 = vpack.c.b16 %v243, %v242
    %v279 = vpack.c.b16 %v245, %v244
    %v280 = vpack.c.b16 %v247, %v246
    %v281 = vpack.c.b16 %v249, %v248
    %314 = vmatpush.bf16.msra.mxu0 %v257
    %315 = vmatpush.bf16.msra.mxu0 %v256
    %316 = vmatpush.bf16.msra.mxu0 %v255
    %317 = vmatpush.bf16.msra.mxu0 %v254
    %318 = vmatpush.bf16.msra.mxu0 %v253
    %319 = vmatpush.bf16.msra.mxu0 %v252
    %320 = vmatpush.bf16.msra.mxu0 %v251
    %321 = vmatpush.bf16.msra.mxu0 %v250
    %322 = vmatmul.bf16.gmra.mxu0 %v114
    %v323 = vpop.f32.mrf.mxu0
    %v324 = vadd.f32 %v100, %v323
    %v325 = vpop.f32.mrf.mxu0
    %v326 = vadd.f32 %v100, %v325
    %327 = vdwg.mxu0
    %328 = vmatpush.bf16.msra.mxu0 %v265
    %329 = vmatpush.bf16.msra.mxu0 %v264
    %330 = vmatpush.bf16.msra.mxu0 %v263
    %331 = vmatpush.bf16.msra.mxu0 %v262
    %332 = vmatpush.bf16.msra.mxu0 %v261
    %333 = vmatpush.bf16.msra.mxu0 %v260
    %334 = vmatpush.bf16.msra.mxu0 %v259
    %335 = vmatpush.bf16.msra.mxu0 %v258
    %336 = vmatmul.bf16.gmra.mxu0 %v115
    %v337 = vpop.f32.mrf.mxu0
    %v338 = vadd.f32 %v324, %v337
    %v339 = vpop.f32.mrf.mxu0
    %v340 = vadd.f32 %v326, %v339
    %341 = vdwg.mxu0
    %342 = vmatpush.bf16.msra.mxu0 %v273
    %343 = vmatpush.bf16.msra.mxu0 %v272
    %344 = vmatpush.bf16.msra.mxu0 %v271
    %345 = vmatpush.bf16.msra.mxu0 %v270
    %346 = vmatpush.bf16.msra.mxu0 %v269
    %347 = vmatpush.bf16.msra.mxu0 %v268
    %348 = vmatpush.bf16.msra.mxu0 %v267
    %349 = vmatpush.bf16.msra.mxu0 %v266
    %350 = vmatmul.bf16.gmra.mxu0 %v116
    %v351 = vpop.f32.mrf.mxu0
    %v352 = vadd.f32 %v338, %v351
    %v353 = vpop.f32.mrf.mxu0
    %v354 = vadd.f32 %v340, %v353
    %355 = vdwg.mxu0
    %356 = vmatpush.bf16.msra.mxu0 %v281
    %357 = vmatpush.bf16.msra.mxu0 %v280
    %358 = vmatpush.bf16.msra.mxu0 %v279
    %359 = vmatpush.bf16.msra.mxu0 %v278
    %360 = vmatpush.bf16.msra.mxu0 %v277
    %361 = vmatpush.bf16.msra.mxu0 %v276
    %362 = vmatpush.bf16.msra.mxu0 %v275
    %363 = vmatpush.bf16.msra.mxu0 %v274
    %364 = vmatmul.bf16.gmra.mxu0 %v117
    %v365 = vpop.f32.mrf.mxu0
    %v366 = vadd.f32 %v352, %v365
    %v367 = vpop.f32.mrf.mxu0
    %v368 = vadd.f32 %v354, %v367
    %369 = vdwg.mxu0
    %370 = vmax.xlane.f32.xlu0 %v366
    %v371 = vpop.xlane.xlu0 %370
    %372 = vmax.xlane.f32.xlu0 %v368
    %v373 = vpop.xlane.xlu0 %372
    %v374 = vsub.f32 %v366, %v371
    %v375 = vsub.f32 %v368, %v373
    %v376 = vmul.f32 %v374, 1.442695
    %v377 = vpow.pop %v376
    %v378 = vmul.f32 %v375, 1.442695
    %v379 = vpow.pop %v378
    %380 = vadd.xlane.f32.xlu0 %v377
    %v381 = vpop.xlane.xlu0 %380
    %382 = vadd.xlane.f32.xlu0 %v379
    %v383 = vpop.xlane.xlu0 %382
    %v384 = vrcp.pop %v381
    %v385 = vmul.f32 %v381, %v384
    %v386 = vsub.f32 1.0, %v385
    %v387 = vmul.f32 %v384, %v386
    %v388 = vadd.f32 %v384, %v387
    %vm389 = vweird.f32 %v381
    %vm390 = vweird.f32 %v384
    %vm391 = vmor %vm389, %vm390
    %v392 = vsel %vm391, %v384, %v388
    %v393 = vand.u32 2147483647, %v381
    %vm394 = vcmp.eq.f32.partialorder %v393, 8.507059e+37
    %v395 = vand.u32 %v381, 2147483648
    %v396 = vor.u32 1.1754944e-38, %v395
    %v397 = vsel %vm394, %v396, %v392
    %v398 = vmul.f32 %v377, %v397
    %v399 = vrcp.pop %v383
    %v400 = vmul.f32 %v383, %v399
    %v401 = vsub.f32 1.0, %v400
    %v402 = vmul.f32 %v399, %v401
    %v403 = vadd.f32 %v399, %v402
    %vm404 = vweird.f32 %v383
    %vm405 = vweird.f32 %v399
    %vm406 = vmor %vm404, %vm405
    %v407 = vsel %vm406, %v399, %v403
    %v408 = vand.u32 2147483647, %v383
    %vm409 = vcmp.eq.f32.partialorder %v408, 8.507059e+37
    %v410 = vand.u32 %v383, 2147483648
    %v411 = vor.u32 1.1754944e-38, %v410
    %v412 = vsel %vm409, %v411, %v407
    %v413 = vmul.f32 %v379, %v412
    %414 = vst [vmem:[%s3] sm:$0xff] %v398
    %415 = vst [vmem:[%s3 + $0x8] sm:$0xff] %v413
    // Predicated region
    $region18: #{mynet_forward_padded.1} parent=1 // pred_check
      _
    $region19: #{mynet_forward_padded.1} parent=1 // pred_check_branch
      %417 = sbr.rel (0) target = $region21
    $region20: #{mynet_forward_padded.1} parent=1 // pred_region
      _
    $region21: #{mynet_forward_padded.1} parent=1 // pred_fallthru
      _
    // Predicated region
    $region22: #{mynet_forward_padded.1} parent=1 // pred_check
      _
    $region23: #{mynet_forward_padded.1} parent=1 // pred_check_branch
      %419 = sbr.rel (0) target = $region25
    $region24: #{mynet_forward_padded.1} parent=1 // pred_region
      _
    $region25: #{mynet_forward_padded.1} parent=1 // pred_fallthru
      _
    %420 = vsyncpa [#allocation3], 1

</llo_original>
